<compile_context>
chip_gen: v5e
topology: v5e:2x2
jax: 0.10.0
libtpu: 0.0.40
codegen_flags: <defaults>
</compile_context>

<pallas_src>
import math
import jax
import jax.numpy as jnp
from jax.experimental import pallas as pl
from jax.experimental.pallas import tpu as pltpu


def _round_up(x, m):
    return ((x + m - 1) // m) * m


def _tpu_compiler_params(dimension_semantics):
    """Version-robust CompilerParams construction."""
    cp_cls = getattr(pltpu, "CompilerParams", None)
    if cp_cls is None:
        cp_cls = getattr(pltpu, "TPUCompilerParams", None)
    if cp_cls is None:
        return None
    return cp_cls(dimension_semantics=dimension_semantics)


# ------------------------- Pallas kernel -------------------------

def _mlp_head_kernel(task_ref, x_ref, w1_ref, b1_ref, w2_ref, b2_ref, out_ref):
    """Fused: relu(x @ W1 + b1) @ W2[task] + b2[task] for one batch tile.

    task_ref: SMEM scalar-prefetch ref (consumed by the index_maps).
    x_ref  : [TM, Dp]   bf16
    w1_ref : [Dp, Hp]   bf16  (hidden weight, pre-transposed + padded)
    b1_ref : [1, Hp]    f32
    w2_ref : [Hp, Cp]   bf16  (selected task head, pre-transposed + padded)
    b2_ref : [1, Cp]    f32
    out_ref: [TM, Cp]   f32
    """
    del task_ref  # used only by the BlockSpec index_maps

    # Hidden layer: bf16 MXU matmul with f32 accumulation, bias + ReLU in f32.
    h = jnp.dot(x_ref[...], w1_ref[...], preferred_element_type=jnp.float32)
    h = jnp.maximum(h + b1_ref[...], 0.0)

    # Classification head for the selected task (lane-dense Cp=128 output).
    o = jnp.dot(h.astype(w2_ref.dtype), w2_ref[...],
                preferred_element_type=jnp.float32)
    out_ref[...] = (o + b2_ref[...]).astype(out_ref.dtype)


# ------------------------- Parameter preparation (init-time) -------------------------

def prepare_params(hidden_w, hidden_b, cls_weight, cls_bias,
                   compute_dtype=jnp.bfloat16):
    """One-time conversion of PyTorch-layout params into kernel layout.

    hidden_w   : [H, D]         -> w1 [Dp, Hp]   (bf16, transposed, zero-padded)
    hidden_b   : [H]            -> b1 [1, Hp]    (f32)
    cls_weight : [T, C, H]      -> w2 [T, Hp, Cp](bf16, per-task transposed, padded)
    cls_bias   : [T, C]         -> b2 [T, 1, Cp] (f32)
    Zero padding is exact for the matmuls and is sliced off the output.
    """
    H, D = hidden_w.shape
    T, C, H2 = cls_weight.shape
    assert H2 == H

    Dp = _round_up(D, 128)
    Hp = _round_up(H, 128)
    Cp = _round_up(C, 128)

    w1 = jnp.pad(hidden_w.T.astype(compute_dtype), ((0, Dp - D), (0, Hp - H)))
    b1 = jnp.pad(hidden_b.astype(jnp.float32), (0, Hp - H))[None, :]
    w2 = jnp.pad(jnp.transpose(cls_weight, (0, 2, 1)).astype(compute_dtype),
                 ((0, 0), (0, Hp - H), (0, Cp - C)))
    b2 = jnp.pad(cls_bias.astype(jnp.float32), ((0, 0), (0, Cp - C)))[:, None, :]

    dims = (D, H, C, T)
    return (w1, b1, w2, b2, dims)


# ------------------------- Forward wrapper -------------------------

def tnrmtl_laf_forward(inputs, params, task_index):
    """JAX wrapper mirroring TNRMTL_LAF_net.forward.

    inputs     : [B, input_dim] (or [input_dim] -> promoted to [1, input_dim])
    params     : output of prepare_params (weights already in kernel layout)
    task_index : python int or traced int scalar (selected inside the kernel)
    """
    w1, b1, w2, b2, (D, H, C, T) = params
    if inputs.ndim < 2:
        inputs = inputs[None, :]

    B = inputs.shape[0]
    Dp, Hp = w1.shape
    Cp = w2.shape[2]

    # Batch tile: multiple of 16 (bf16 sublane packing); larger tiles for big B.
    TM = min(256, _round_up(B, 16))
    Bp = _round_up(B, TM)

    x = jnp.pad(inputs.astype(w1.dtype), ((0, Bp - B), (0, Dp - D)))
    task_arr = jnp.asarray(task_index, dtype=jnp.int32).reshape((1,))

    grid_spec = pltpu.PrefetchScalarGridSpec(
        num_scalar_prefetch=1,
        grid=(Bp // TM,),
        in_specs=[
            pl.BlockSpec((TM, Dp), lambda i, task: (i, 0)),                 # x tile
            pl.BlockSpec((Dp, Hp), lambda i, task: (0, 0)),                 # W1 (VMEM resident)
            pl.BlockSpec((1, Hp), lambda i, task: (0, 0)),                  # b1
            pl.BlockSpec((None, Hp, Cp), lambda i, task: (task[0], 0, 0)),  # W2[task]
            pl.BlockSpec((None, 1, Cp), lambda i, task: (task[0], 0, 0)),   # b2[task]
        ],
        out_specs=pl.BlockSpec((TM, Cp), lambda i, task: (i, 0)),
    )

    out = pl.pallas_call(
        _mlp_head_kernel,
        out_shape=jax.ShapeDtypeStruct((Bp, Cp), jnp.float32),
        grid_spec=grid_spec,
        compiler_params=_tpu_compiler_params(("parallel",)),
    )(task_arr, x, w1, b1, w2, b2)

    return out[:B, :C]


# ------------------------- Parameter init -------------------------

def init_params(key, input_dim, hidden_dim, class_num, task_num):
    """Deterministic init matching the shapes/scales of the PyTorch module."""
    k1, k2, k3, k4 = jax.random.split(key, 4)

    bound_w1 = 1.0 / math.sqrt(input_dim)
    hidden_w = jax.random.uniform(k1, (hidden_dim, input_dim), jnp.float32,
                                  -bound_w1, bound_w1)
    hidden_b = jax.random.uniform(k2, (hidden_dim,), jnp.float32,
                                  -bound_w1, bound_w1)

    bound_w2 = 1.0 / math.sqrt(hidden_dim)
    cls_weight = jax.random.uniform(k3, (task_num, class_num, hidden_dim),
                                    jnp.float32, -bound_w2, bound_w2)
    cls_bias = jax.random.uniform(k4, (task_num, class_num), jnp.float32,
                                  -bound_w2, bound_w2)
    return hidden_w, hidden_b, cls_weight, cls_bias


# ------------------------- References (plain JAX) -------------------------

def reference_forward(inputs, hidden_w, hidden_b, cls_weight, cls_bias, task_index):
    """Exact f32 PyTorch-semantics reference."""
    if inputs.ndim < 2:
        inputs = inputs[None, :]
    h = jnp.maximum(inputs @ hidden_w.T + hidden_b, 0.0)
    return h @ cls_weight[task_index].T + cls_bias[task_index]


def reference_forward_bf16(inputs, hidden_w, hidden_b, cls_weight, cls_bias, task_index):
    """Reference matching the kernel's bf16-operand / f32-accumulation scheme."""
    if inputs.ndim < 2:
        inputs = inputs[None, :]
    x = inputs.astype(jnp.bfloat16)
    w1 = hidden_w.T.astype(jnp.bfloat16)
    h = jnp.dot(x, w1, preferred_element_type=jnp.float32) + hidden_b
    h = jnp.maximum(h, 0.0)
    w2 = cls_weight[task_index].T.astype(jnp.bfloat16)
    o = jnp.dot(h.astype(jnp.bfloat16), w2, preferred_element_type=jnp.float32)
    return o + cls_bias[task_index]


# ------------------------- Main -------------------------

if __name__ == "__main__":
    batch, input_dim, hidden_dim, class_num, task_num = 4, 32, 64, 8, 3
    task_index = 1

    key = jax.random.PRNGKey(0)
    kx, kp = jax.random.split(key)

    x = jax.random.normal(kx, (batch, input_dim), jnp.float32)
    hidden_w, hidden_b, cls_weight, cls_bias = init_params(
        kp, input_dim, hidden_dim, class_num, task_num)

    # One-time layout/precision preparation (would live at module-init time).
    params = prepare_params(hidden_w, hidden_b, cls_weight, cls_bias)

    out = tnrmtl_laf_forward(x, params, task_index)
    out = jax.block_until_ready(out)

    ref_bf16 = reference_forward_bf16(x, hidden_w, hidden_b, cls_weight, cls_bias,
                                      task_index)
    ref_f32 = reference_forward(x, hidden_w, hidden_b, cls_weight, cls_bias,
                                task_index)

    assert out.shape == (batch, class_num)
    assert jnp.allclose(out, ref_bf16, atol=1e-3, rtol=1e-3), \
        "mismatch vs bf16-compute reference"
    assert jnp.allclose(out, ref_f32, atol=1e-1, rtol=1e-1), \
        "mismatch vs f32 reference"

    # TODO(synk): get_regular_term uses torch.svd (nuclear norm of the unfolded
    # cls_weight tensor); SVD has no clean Pallas equivalent and is not part of
    # the forward pass, so it is intentionally not implemented.

    print("KERNEL_OK")
</pallas_src>

<mosaic_0001>
module attributes {stable_mosaic.version = 11 : i64} {
  func.func @_mlp_head_kernel(%arg0: i32, %arg1: memref<1xi32, #tpu.memory_space<smem>>, %arg2: memref<16x128xbf16, #tpu.memory_space<vmem>>, %arg3: memref<128x128xbf16, #tpu.memory_space<vmem>>, %arg4: memref<1x128xf32, #tpu.memory_space<vmem>>, %arg5: memref<1x128x128xbf16, #tpu.memory_space<vmem>>, %arg6: memref<1x1x128xf32, #tpu.memory_space<vmem>>, %arg7: memref<16x128xf32, #tpu.memory_space<vmem>>) attributes {dimension_semantics = [#tpu.dimension_semantics<parallel>], iteration_bounds = array<i64: 1>, scalar_prefetch = 1 : i64, scratch_operands = 0 : i64, tpu.core_type = #tpu.core_type<tc>, window_params = [{transform_indices = @transform_0, window_bounds = array<i64: 16, 128>}, {pipeline_mode = #tpu.pipeline_mode<synchronous>, transform_indices = @transform_1, window_bounds = array<i64: 128, 128>}, {pipeline_mode = #tpu.pipeline_mode<synchronous>, transform_indices = @transform_2, window_bounds = array<i64: 1, 128>}, {transform_indices = @transform_3, window_bounds = array<i64: 1, 128, 128>}, {transform_indices = @transform_4, window_bounds = array<i64: 1, 1, 128>}, {transform_indices = @transform_5, window_bounds = array<i64: 16, 128>}]} {
    %c0 = arith.constant 0 : index
    %c0_0 = arith.constant 0 : index
    %0 = vector.load %arg2[%c0, %c0_0] : memref<16x128xbf16, #tpu.memory_space<vmem>>, vector<16x128xbf16>
    %c0_1 = arith.constant 0 : index
    %c0_2 = arith.constant 0 : index
    %1 = vector.load %arg3[%c0_1, %c0_2] : memref<128x128xbf16, #tpu.memory_space<vmem>>, vector<128x128xbf16>
    %cst = arith.constant dense<0.000000e+00> : vector<16x128xf32>
    %2 = tpu.matmul %0, %1, %cst {dimension_numbers = #tpu.dot_dimension_numbers<[1], [0], [0], [1], [0, 0, 1, 1], [], []>} : vector<16x128xbf16>, vector<128x128xbf16>, vector<16x128xf32> -> vector<16x128xf32>
    %c0_3 = arith.constant 0 : index
    %c0_4 = arith.constant 0 : index
    %3 = vector.load %arg4[%c0_3, %c0_4] : memref<1x128xf32, #tpu.memory_space<vmem>>, vector<1x128xf32>
    %4 = vector.broadcast %3 : vector<1x128xf32> to vector<16x128xf32>
    %5 = arith.addf %2, %4 : vector<16x128xf32>
    %cst_5 = arith.constant 0.000000e+00 : f32
    %6 = vector.broadcast %cst_5 : f32 to vector<16x128xf32>
    %7 = arith.maximumf %5, %6 : vector<16x128xf32>
    %8 = arith.truncf %7 : vector<16x128xf32> to vector<16x128xbf16>
    %c0_6 = arith.constant 0 : index
    %c0_7 = arith.constant 0 : index
    %c0_8 = arith.constant 0 : index
    %9 = vector.load %arg5[%c0_6, %c0_7, %c0_8] : memref<1x128x128xbf16, #tpu.memory_space<vmem>>, vector<1x128x128xbf16>
    %10 = vector.shape_cast %9 : vector<1x128x128xbf16> to vector<128x128xbf16>
    %cst_9 = arith.constant dense<0.000000e+00> : vector<16x128xf32>
    %11 = tpu.matmul %8, %10, %cst_9 {dimension_numbers = #tpu.dot_dimension_numbers<[1], [0], [0], [1], [0, 0, 1, 1], [], []>} : vector<16x128xbf16>, vector<128x128xbf16>, vector<16x128xf32> -> vector<16x128xf32>
    %c0_10 = arith.constant 0 : index
    %c0_11 = arith.constant 0 : index
    %c0_12 = arith.constant 0 : index
    %12 = vector.load %arg6[%c0_10, %c0_11, %c0_12] : memref<1x1x128xf32, #tpu.memory_space<vmem>>, vector<1x1x128xf32>
    %13 = vector.shape_cast %12 : vector<1x1x128xf32> to vector<1x128xf32>
    %14 = vector.broadcast %13 : vector<1x128xf32> to vector<16x128xf32>
    %15 = arith.addf %11, %14 : vector<16x128xf32>
    %c0_13 = arith.constant 0 : index
    %c0_14 = arith.constant 0 : index
    %16 = vector.load %arg7[%c0_13, %c0_14] : memref<16x128xf32, #tpu.memory_space<vmem>>, vector<16x128xf32>
    tpu.vector_store %arg7[%c0_13, %c0_14], %15 {strides = array<i32>} : memref<16x128xf32, #tpu.memory_space<vmem>>, vector<16x128xf32>,
    return
  }
  func.func @transform_0(%arg0: i32, %arg1: memref<1xi32, #tpu.memory_space<smem>>) -> (i32, i32) {
    %c0_i32 = arith.constant 0 : i32
    %c0_i32_0 = arith.constant 0 : i32
    return %arg0, %c0_i32 : i32, i32
  }
  func.func @transform_1(%arg0: i32, %arg1: memref<1xi32, #tpu.memory_space<smem>>) -> (i32, i32) {
    %c0_i32 = arith.constant 0 : i32
    %c0_i32_0 = arith.constant 0 : i32
    %c0_i32_1 = arith.constant 0 : i32
    return %c0_i32, %c0_i32_0 : i32, i32
  }
  func.func @transform_2(%arg0: i32, %arg1: memref<1xi32, #tpu.memory_space<smem>>) -> (i32, i32) {
    %c0_i32 = arith.constant 0 : i32
    %c0_i32_0 = arith.constant 0 : i32
    %c0_i32_1 = arith.constant 0 : i32
    return %c0_i32, %c0_i32_0 : i32, i32
  }
  func.func @transform_3(%arg0: i32, %arg1: memref<1xi32, #tpu.memory_space<smem>>) -> (i32, i32, i32) {
    %c0 = arith.constant 0 : index
    %0 = memref.load %arg1[%c0] : memref<1xi32, #tpu.memory_space<smem>>
    %c0_i32 = arith.constant 0 : i32
    %c0_i32_0 = arith.constant 0 : i32
    %c0_i32_1 = arith.constant 0 : i32
    return %0, %c0_i32, %c0_i32_0 : i32, i32, i32
  }
  func.func @transform_4(%arg0: i32, %arg1: memref<1xi32, #tpu.memory_space<smem>>) -> (i32, i32, i32) {
    %c0 = arith.constant 0 : index
    %0 = memref.load %arg1[%c0] : memref<1xi32, #tpu.memory_space<smem>>
    %c0_i32 = arith.constant 0 : i32
    %c0_i32_0 = arith.constant 0 : i32
    %c0_i32_1 = arith.constant 0 : i32
    return %0, %c0_i32, %c0_i32_0 : i32, i32, i32
  }
  func.func @transform_5(%arg0: i32, %arg1: memref<1xi32, #tpu.memory_space<smem>>) -> (i32, i32) {
    %c0_i32 = arith.constant 0 : i32
    %c0_i32_0 = arith.constant 0 : i32
    return %arg0, %c0_i32 : i32, i32
  }
}

</mosaic_0001>

<llo_original>
// kernel: tpu_custom_call.1
$region0: #{tpu_custom_call.1}
  #allocation0 [shape = 'u32[]', space=smem, size = 0x4, offset = 0x4, fixed_abs, tag = 'smem constant byte address 0x4 - core index']
  #allocation1 [shape = 'u32[72,128]{1,0:T(1,128)}', space=vmem, size = 0x9000, scoped, tag = 'internal scratch']
  #allocation2 [shape = 's32[1]{0}', space=sflag, size = 0x4, scoped, tag = 'scoped memory for tpu_custom_call.1']
  #allocation3 [shape = 's32[1]{0:T(128)S(6)}', space=smem, size = 0x200, scoped, tag = 'prefetched SMEM operand 0']
  %s0 = inlined_call_operand.<no memory space> [shape: s32[1], index: 0, kind: input, shape index: {}]
  %s1 = inlined_call_operand.hbm [shape: bf16[16,128], index: 1, kind: input, shape index: {}]
  %s2 = inlined_call_operand.hbm [shape: bf16[128,128], index: 2, kind: input, shape index: {}]
  %s3 = inlined_call_operand.vmem [shape: f32[1,128], index: 3, kind: input, shape index: {}]
  %s4 = inlined_call_operand.hbm [shape: bf16[3,128,128], index: 4, kind: input, shape index: {}]
  %s5 = inlined_call_operand.vmem [shape: f32[3,1,128], index: 5, kind: input, shape index: {}]
  %s6 = inlined_call_operand.hbm [shape: f32[16,128], index: 6, kind: output, shape index: {}]
  %s7 = sld [smem:[#allocation0]]
  $region42: #{tpu_custom_call.1} parent=0
    _
  %s9 = ssub.s32 1, %s7
  %s10 = scalar_select 0, %s9, %s7
  %11 = sst [smem:[#allocation3]] %s0
  $region1: #{tpu_custom_call.1} parent=0
    #allocation4 [shape = 'u8[4096]{0}', space=vmem, size = 0x1000, scoped, tag = 'input window, operand 1, single buffered']
    #allocation5 [shape = 's32[1]{0}', space=sflag, size = 0x4, scoped, tag = 'scoped memory for tpu_custom_call.1']
    #allocation6 [shape = 's32[1]{0}', space=sflag, size = 0x4, scoped, tag = 'scoped memory for tpu_custom_call.1']
    #allocation7 [shape = 'u8[32768]{0}', space=vmem, size = 0x8000, scoped, tag = 'input window, operand 2, single buffered']
    #allocation8 [shape = 's32[1]{0}', space=sflag, size = 0x4, scoped, tag = 'scoped memory for tpu_custom_call.1']
    #allocation9 [shape = 'u8[32768]{0}', space=vmem, size = 0x8000, scoped, tag = 'input window, operand 4, single buffered']
    #allocation10 [shape = 'u8[8192]{0}', space=vmem, size = 0x2000, scoped, tag = 'output window, operand 0, single buffered']
    %12 = vsyncpa [#allocation5], 0
    %13 = vsyncpa [#allocation8], 0
    %14 = vsyncpa [#allocation6], 0
    // Predicated region
    $region2: #{tpu_custom_call.1} parent=1 // pred_check
      _
    $region3: #{tpu_custom_call.1} parent=1 // pred_check_branch
      %16 = sbr.rel (0) target = $region5
    $region4: #{tpu_custom_call.1} parent=1 // pred_region
      %18 = vsyncadd [#allocation5], 0
      %s19 = sshll.u32 %s1, 4
      %s20 = int_to_ptr.hbm [resolvable:$true] %s19
      %s21 = sshll.u32 [#allocation4], 4
      %s22 = int_to_ptr.vmem [resolvable:$true] %s21
      %27 = dma.hbm_to_vmem [thread:$0]  %s20, 128, %s22, [#allocation5], 64, 64, 4
    $region5: #{tpu_custom_call.1} parent=1 // pred_fallthru
      _
    // Predicated region
    $region6: #{tpu_custom_call.1} parent=1 // pred_check
      _
    $region7: #{tpu_custom_call.1} parent=1 // pred_check_branch
      %29 = sbr.rel (0) target = $region9
    $region8: #{tpu_custom_call.1} parent=1 // pred_region
      %31 = vsyncadd [#allocation8], 0
      %s32 = sshll.u32 %s2, 4
      %s33 = int_to_ptr.hbm [resolvable:$true] %s32
      %s34 = sshll.u32 [#allocation7], 4
      %s35 = int_to_ptr.vmem [resolvable:$true] %s34
      %40 = dma.hbm_to_vmem [thread:$0]  %s33, 1024, %s35, [#allocation8], 64, 64, 4
    $region9: #{tpu_custom_call.1} parent=1 // pred_fallthru
      _
    // Predicated region
    $region10: #{tpu_custom_call.1} parent=1 // pred_check
      _
    $region11: #{tpu_custom_call.1} parent=1 // pred_check_branch
      %42 = sbr.rel (0) target = $region13
    $region12: #{tpu_custom_call.1} parent=1 // pred_region
      _
    $region13: #{tpu_custom_call.1} parent=1 // pred_fallthru
      _
    // Predicated region
    $region14: #{tpu_custom_call.1} parent=1 // pred_check
      _
    $region15: #{tpu_custom_call.1} parent=1 // pred_check_branch
      %44 = sbr.rel (0) target = $region17
    $region16: #{tpu_custom_call.1} parent=1 // pred_region
      %s45 = sld [smem:[#allocation3]]
      %47 = vsyncadd [#allocation8], 0
      %s48 = smul.addr %s45, 16
      %s49 = smul.addr %s48, 4
      %s50 = scalar_lea.hbm %s4, %s49
      %s51 = sshll.u32 %s50, 4
      %s52 = int_to_ptr.hbm [resolvable:$true] %s51
      %s53 = sshll.u32 [#allocation9], 4
      %s54 = int_to_ptr.vmem [resolvable:$true] %s53
      %59 = dma.hbm_to_vmem [thread:$0]  %s52, 1024, %s54, [#allocation8], 64, 64, 4
    $region17: #{tpu_custom_call.1} parent=1 // pred_fallthru
      _
    // Predicated region
    $region18: #{tpu_custom_call.1} parent=1 // pred_check
      _
    $region19: #{tpu_custom_call.1} parent=1 // pred_check_branch
      %61 = sbr.rel (0) target = $region21
    $region20: #{tpu_custom_call.1} parent=1 // pred_region
      %s62 = sld [smem:[#allocation3]]
      %p63 = scmp.lt.s32.totalorder %s62, 2
      %s64 = scalar_select %p63, %s62, 2
      %s65 = scalar_lea.vmem %s5, %s64
      %s66 = sld [smem:[#allocation3]]
    $region21: #{tpu_custom_call.1} parent=1 // pred_fallthru
      _
    // Predicated region
    $region22: #{tpu_custom_call.1} parent=1 // pred_check
      _
    $region23: #{tpu_custom_call.1} parent=1 // pred_check_branch
      %68 = sbr.rel (0) target = $region25
    $region24: #{tpu_custom_call.1} parent=1 // pred_region
      %70 = dma.done [#allocation5], 128
    $region25: #{tpu_custom_call.1} parent=1 // pred_fallthru
      _
    // Predicated region
    $region26: #{tpu_custom_call.1} parent=1 // pred_check
      _
    $region27: #{tpu_custom_call.1} parent=1 // pred_check_branch
      %72 = sbr.rel (0) target = $region29
    $region28: #{tpu_custom_call.1} parent=1 // pred_region
      %74 = dma.done [#allocation8], 1024
    $region29: #{tpu_custom_call.1} parent=1 // pred_fallthru
      _
    // Predicated region
    $region30: #{tpu_custom_call.1} parent=1 // pred_check
      _
    $region31: #{tpu_custom_call.1} parent=1 // pred_check_branch
      %76 = sbr.rel (0) target = $region33
    $region32: #{tpu_custom_call.1} parent=1 // pred_region
      %78 = dma.done [#allocation8], 1024
    $region33: #{tpu_custom_call.1} parent=1 // pred_fallthru
      _
    %s79 = sld [smem:[#allocation3]]
    %p80 = scmp.lt.s32.totalorder %s79, 2
    %s81 = scalar_select %p80, %s79, 2
    %s82 = scalar_lea.vmem %s5, %s81
    %s83 = sld [smem:[#allocation3]]
    %s84 = sld [smem:[#allocation3]]
    %p85 = scmp.lt.s32.totalorder %s84, 2
    %s86 = scalar_select %p85, %s84, 2
    %s87 = scalar_lea.vmem %s5, %s86
    %s88 = sld [smem:[#allocation3]]
    %v89 = vld [vmem:[#allocation4] sm:$0xf]
    %v90 = vld [vmem:[#allocation4 + $0x4] sm:$0xf]
    %v91 = vld [vmem:[#allocation7] sm:$0xf]
    %v92 = vld [vmem:[#allocation7 + $0x4] sm:$0xf]
    %v93 = vld [vmem:[#allocation7 + $0x8] sm:$0xf]
    %v94 = vld [vmem:[#allocation7 + $0xc] sm:$0xf]
    %v95 = vld [vmem:[#allocation7 + $0x10] sm:$0xf]
    %v96 = vld [vmem:[#allocation7 + $0x14] sm:$0xf]
    %v97 = vld [vmem:[#allocation7 + $0x18] sm:$0xf]
    %v98 = vld [vmem:[#allocation7 + $0x1c] sm:$0xf]
    %v99 = vld [vmem:[#allocation7 + $0x20] sm:$0xf]
    %v100 = vld [vmem:[#allocation7 + $0x24] sm:$0xf]
    %v101 = vld [vmem:[#allocation7 + $0x28] sm:$0xf]
    %v102 = vld [vmem:[#allocation7 + $0x2c] sm:$0xf]
    %v103 = vld [vmem:[#allocation7 + $0x30] sm:$0xf]
    %v104 = vld [vmem:[#allocation7 + $0x34] sm:$0xf]
    %v105 = vld [vmem:[#allocation7 + $0x38] sm:$0xf]
    %v106 = vld [vmem:[#allocation7 + $0x3c] sm:$0xf]
    %v107 = vld [vmem:[%s3] sm:$0x1]
    %v109 = vperm.slane %v107, 0
    %v113 = vunpack.c.l.b16 %v89
    %v114 = vunpack.c.l.b16 %v90
    %v115 = vpack.c.b16 %v114, %v113
    %v133 = vunpack.c.l.b16 %v91
    %v134 = vunpack.c.l.b16 %v92
    %v135 = vunpack.c.l.b16 %v93
    %v136 = vunpack.c.l.b16 %v94
    %v137 = vunpack.c.l.b16 %v95
    %v138 = vunpack.c.l.b16 %v96
    %v139 = vunpack.c.l.b16 %v97
    %v140 = vunpack.c.l.b16 %v98
    %v141 = vunpack.c.l.b16 %v99
    %v142 = vunpack.c.l.b16 %v100
    %v143 = vunpack.c.l.b16 %v101
    %v144 = vunpack.c.l.b16 %v102
    %v145 = vunpack.c.l.b16 %v103
    %v146 = vunpack.c.l.b16 %v104
    %v147 = vunpack.c.l.b16 %v105
    %v148 = vunpack.c.l.b16 %v106
    %v149 = vpack.c.b16 %v134, %v133
    %v150 = vpack.c.b16 %v136, %v135
    %v151 = vpack.c.b16 %v138, %v137
    %v152 = vpack.c.b16 %v140, %v139
    %v153 = vpack.c.b16 %v142, %v141
    %v154 = vpack.c.b16 %v144, %v143
    %v155 = vpack.c.b16 %v146, %v145
    %v156 = vpack.c.b16 %v148, %v147
    %165 = vmatpush.bf16.msra.mxu0 %v156
    %166 = vmatpush.bf16.msra.mxu0 %v155
    %167 = vmatpush.bf16.msra.mxu0 %v154
    %168 = vmatpush.bf16.msra.mxu0 %v153
    %169 = vmatpush.bf16.msra.mxu0 %v152
    %170 = vmatpush.bf16.msra.mxu0 %v151
    %171 = vmatpush.bf16.msra.mxu0 %v150
    %172 = vmatpush.bf16.msra.mxu0 %v149
    %173 = vmatmul.bf16.gmra.mxu0 %v115
    %v174 = vpop.f32.mrf.mxu0
    %v175 = vadd.f32 %v109, %v174
    %v176 = vpop.f32.mrf.mxu0
    %v177 = vadd.f32 %v109, %v176
    %178 = vdwg.mxu0
    %v179 = vmax.f32 %v175, 0.0
    %v180 = vmax.f32 %v177, 0.0
    %v181 = vpack.c.bf16 %v180, %v179
    %v182 = vld [vmem:[#allocation9] sm:$0xf]
    %v183 = vld [vmem:[#allocation9 + $0x4] sm:$0xf]
    %v184 = vld [vmem:[#allocation9 + $0x8] sm:$0xf]
    %v185 = vld [vmem:[#allocation9 + $0xc] sm:$0xf]
    %v186 = vld [vmem:[#allocation9 + $0x10] sm:$0xf]
    %v187 = vld [vmem:[#allocation9 + $0x14] sm:$0xf]
    %v188 = vld [vmem:[#allocation9 + $0x18] sm:$0xf]
    %v189 = vld [vmem:[#allocation9 + $0x1c] sm:$0xf]
    %v190 = vld [vmem:[#allocation9 + $0x20] sm:$0xf]
    %v191 = vld [vmem:[#allocation9 + $0x24] sm:$0xf]
    %v192 = vld [vmem:[#allocation9 + $0x28] sm:$0xf]
    %v193 = vld [vmem:[#allocation9 + $0x2c] sm:$0xf]
    %v194 = vld [vmem:[#allocation9 + $0x30] sm:$0xf]
    %v195 = vld [vmem:[#allocation9 + $0x34] sm:$0xf]
    %v196 = vld [vmem:[#allocation9 + $0x38] sm:$0xf]
    %v197 = vld [vmem:[#allocation9 + $0x3c] sm:$0xf]
    %v198 = vld [vmem:[%s87] sm:$0x1]
    %v200 = vperm.slane %v198, 0
    %v218 = vunpack.c.l.b16 %v182
    %v219 = vunpack.c.l.b16 %v183
    %v220 = vunpack.c.l.b16 %v184
    %v221 = vunpack.c.l.b16 %v185
    %v222 = vunpack.c.l.b16 %v186
    %v223 = vunpack.c.l.b16 %v187
    %v224 = vunpack.c.l.b16 %v188
    %v225 = vunpack.c.l.b16 %v189
    %v226 = vunpack.c.l.b16 %v190
    %v227 = vunpack.c.l.b16 %v191
    %v228 = vunpack.c.l.b16 %v192
    %v229 = vunpack.c.l.b16 %v193
    %v230 = vunpack.c.l.b16 %v194
    %v231 = vunpack.c.l.b16 %v195
    %v232 = vunpack.c.l.b16 %v196
    %v233 = vunpack.c.l.b16 %v197
    %v234 = vpack.c.b16 %v219, %v218
    %v235 = vpack.c.b16 %v221, %v220
    %v236 = vpack.c.b16 %v223, %v222
    %v237 = vpack.c.b16 %v225, %v224
    %v238 = vpack.c.b16 %v227, %v226
    %v239 = vpack.c.b16 %v229, %v228
    %v240 = vpack.c.b16 %v231, %v230
    %v241 = vpack.c.b16 %v233, %v232
    %250 = vmatpush.bf16.msra.mxu0 %v241
    %251 = vmatpush.bf16.msra.mxu0 %v240
    %252 = vmatpush.bf16.msra.mxu0 %v239
    %253 = vmatpush.bf16.msra.mxu0 %v238
    %254 = vmatpush.bf16.msra.mxu0 %v237
    %255 = vmatpush.bf16.msra.mxu0 %v236
    %256 = vmatpush.bf16.msra.mxu0 %v235
    %257 = vmatpush.bf16.msra.mxu0 %v234
    %258 = vmatmul.bf16.gmra.mxu0 %v181
    %v259 = vpop.f32.mrf.mxu0
    %v260 = vadd.f32 %v200, %v259
    %v261 = vpop.f32.mrf.mxu0
    %v262 = vadd.f32 %v200, %v261
    %263 = vdwg.mxu0
    %264 = vst [vmem:[#allocation10] sm:$0xff] %v260
    %265 = vst [vmem:[#allocation10 + $0x8] sm:$0xff] %v262
    // Predicated region
    $region34: #{tpu_custom_call.1} parent=1 // pred_check
      _
    $region35: #{tpu_custom_call.1} parent=1 // pred_check_branch
      %267 = sbr.rel (0) target = $region37
    $region36: #{tpu_custom_call.1} parent=1 // pred_region
      %269 = vsyncadd [#allocation6], 0
      %s270 = sshll.u32 [#allocation10], 4
      %s271 = int_to_ptr.vmem [resolvable:$true] %s270
      %s272 = sshll.u32 %s6, 4
      %s273 = int_to_ptr.hbm [resolvable:$true] %s272
      %278 = dma.vmem_to_hbm [thread:$0]  %s271, 256, %s273, [#allocation6], 128, 128, 8
    $region37: #{tpu_custom_call.1} parent=1 // pred_fallthru
      _
    // Predicated region
    $region38: #{tpu_custom_call.1} parent=1 // pred_check
      _
    $region39: #{tpu_custom_call.1} parent=1 // pred_check_branch
      %280 = sbr.rel (0) target = $region41
    $region40: #{tpu_custom_call.1} parent=1 // pred_region
      %282 = dma.done [#allocation6], 256
    $region41: #{tpu_custom_call.1} parent=1 // pred_fallthru
      _
    %283 = vsyncpa [#allocation5], 1
    %284 = vsyncpa [#allocation8], 1
    %285 = vsyncpa [#allocation6], 1

</llo_original>
